<compile_context>
chip_gen: v5e
topology: v5e:2x2
jax: 0.10.0
libtpu: 0.0.40
codegen_flags: <defaults>
</compile_context>

<pallas_src>
import math
import jax
import jax.numpy as jnp
import numpy as np
from jax import lax
from jax.experimental import pallas as pl
from jax.experimental.pallas import tpu as pltpu

# ---- model hyperparameters (small synthetic config) ----
B = 2          # batch
S = 8          # seq_len
D = 32         # d_model
H = 4          # num_heads
HD = D // H    # head dim
F = 64         # d_ff
BS = B * S     # flattened token count
LN_EPS = 1e-5
SCALE = 1.0 / math.sqrt(HD)


def _layer_norm(x, gamma, beta):
    mu = jnp.mean(x, axis=-1, keepdims=True)
    var = jnp.mean((x - mu) * (x - mu), axis=-1, keepdims=True)
    return (x - mu) * lax.rsqrt(var + LN_EPS) * gamma + beta


def encoder_layer_kernel(
    x_ref,        # (BS, D)
    bias_ref,     # (BS, BS) additive attention bias (block-diagonal batch + key padding)
    wqkv_ref,     # (D, 3D)  [Wq*SCALE | Wk | Wv]
    bqkv_ref,     # (1, 3D)
    wo_ref,       # (D, D)
    w1_ref,       # (D, F)
    b1_ref,       # (1, F)
    w2_ref,       # (F, D)
    vec_ref,      # (8, D) rows: bo, g1, be1, bf2, g2, be2, pad, pad
    o_ref,        # (BS, D)
):
    x = x_ref[...]
    bias = bias_ref[...]

    # --- fused QKV projection (single MXU push) ---
    qkv = jnp.dot(x, wqkv_ref[...], preferred_element_type=jnp.float32) + bqkv_ref[...]
    q = qkv[:, 0 * D:1 * D]   # already scaled by 1/sqrt(HD)
    k = qkv[:, 1 * D:2 * D]
    v = qkv[:, 2 * D:3 * D]

    # --- multi-head attention over the flattened (BS) token axis; the additive bias keeps
    #     attention block-diagonal per batch element and applies the key-padding mask ---
    heads = []
    for h in range(H):
        lo, hi = h * HD, (h + 1) * HD
        qh = q[:, lo:hi]
        kh = k[:, lo:hi]
        vh = v[:, lo:hi]
        scores = lax.dot_general(qh, kh, (((1,), (1,)), ((), ())),
                                 preferred_element_type=jnp.float32) + bias   # (BS, BS)
        scores = scores - jnp.max(scores, axis=-1, keepdims=True)
        p = jnp.exp(scores)
        p = p * pl.reciprocal(jnp.sum(p, axis=-1, keepdims=True), approx=True)
        heads.append(jnp.dot(p, vh, preferred_element_type=jnp.float32))      # (BS, HD)
    heads_cat = jnp.concatenate(heads, axis=-1)                               # (BS, D)

    # --- single output projection ---
    bo = vec_ref[0:1, :]
    attn = jnp.dot(heads_cat, wo_ref[...], preferred_element_type=jnp.float32) + bo

    # --- residual + LayerNorm 1 (dropout = identity in eval) ---
    g1, be1 = vec_ref[1:2, :], vec_ref[2:3, :]
    h1 = _layer_norm(x + attn, g1, be1)

    # --- position-wise feed-forward: Linear -> ReLU -> Linear ---
    ff = jnp.maximum(jnp.dot(h1, w1_ref[...], preferred_element_type=jnp.float32) + b1_ref[...], 0.0)
    bf2 = vec_ref[3:4, :]
    ff = jnp.dot(ff, w2_ref[...], preferred_element_type=jnp.float32) + bf2

    # --- residual + LayerNorm 2 ---
    g2, be2 = vec_ref[4:5, :], vec_ref[5:6, :]
    h2 = _layer_norm(h1 + ff, g2, be2)

    o_ref[...] = h2.astype(o_ref.dtype)


def encoder_layer(x, mask, params):
    """x: (B, S, D) f32, mask: (B, S) f32 (1=attend, 0=masked)."""
    (wq, bq, wk, bk, wv, bv, wo, bo, g1, be1, w1, bf1, w2, bf2, g2, be2) = params

    # Host-side packing (trace-time; free at runtime).
    wqkv = jnp.concatenate([wq * SCALE, wk, wv], axis=1)          # (D, 3D), scale folded into Q
    bqkv = jnp.concatenate([bq * SCALE, bk, bv], axis=1)          # (1, 3D)
    vecs = jnp.concatenate([bo, g1, be1, bf2, g2, be2,
                            jnp.zeros((2, D), jnp.float32)], axis=0)   # (8, D)

    # Precompute additive attention bias over the flattened token axis:
    # attend iff same batch element AND key not padded.
    batch_id = jnp.repeat(jnp.arange(B), S)                       # (BS,)
    same_batch = batch_id[:, None] == batch_id[None, :]
    key_valid = (mask.reshape(BS) > 0.5)[None, :]
    attn_bias = jnp.where(same_batch & key_valid, 0.0, -1e9).astype(jnp.float32)  # (BS, BS)

    x2d = x.reshape(BS, D)

    full = lambda shape: pl.BlockSpec(shape, lambda i: (0,) * len(shape))
    in_specs = [
        full((BS, D)),      # x
        full((BS, BS)),     # attention bias
        full((D, 3 * D)),   # Wqkv
        full((1, 3 * D)),   # bqkv
        full((D, D)),       # Wo
        full((D, F)),       # FF W1
        full((1, F)),       # FF b1
        full((F, D)),       # FF W2
        full((8, D)),       # packed bo/g1/be1/bf2/g2/be2
    ]

    out2d = pl.pallas_call(
        encoder_layer_kernel,
        out_shape=jax.ShapeDtypeStruct((BS, D), jnp.float32),
        grid=(1,),   # single step: whole problem fits VMEM; avoids per-step pipeline overhead
        in_specs=in_specs,
        out_specs=pl.BlockSpec((BS, D), lambda i: (0, 0)),
        compiler_params=pltpu.CompilerParams(dimension_semantics=("arbitrary",)),
    )(x2d, attn_bias, wqkv, bqkv, wo, w1, bf1, w2, vecs)

    return out2d.reshape(B, S, D)


def reference(x, mask, params):
    (wq, bq, wk, bk, wv, bv, wo, bo, g1, be1, w1, bf1, w2, bf2, g2, be2) = params
    q = x @ wq + bq
    k = x @ wk + bk
    v = x @ wv + bv
    qh = q.reshape(B, S, H, HD).transpose(0, 2, 1, 3)
    kh = k.reshape(B, S, H, HD).transpose(0, 2, 1, 3)
    vh = v.reshape(B, S, H, HD).transpose(0, 2, 1, 3)
    scores = jnp.einsum("bhqd,bhkd->bhqk", qh, kh) * SCALE
    scores = scores + jnp.where(mask[:, None, None, :] > 0.5, 0.0, -1e9)
    p = jax.nn.softmax(scores, axis=-1)
    heads = jnp.einsum("bhqk,bhkd->bhqd", p, vh).transpose(0, 2, 1, 3).reshape(B, S, D)
    attn = heads @ wo + bo

    def ln(y, g, b):
        mu = y.mean(-1, keepdims=True)
        var = ((y - mu) ** 2).mean(-1, keepdims=True)
        return (y - mu) / jnp.sqrt(var + LN_EPS) * g + b

    h1 = ln(x + attn, g1, be1)
    ff = jnp.maximum(h1 @ w1 + bf1, 0.0) @ w2 + bf2
    return ln(h1 + ff, g2, be2)


def make_params(key):
    keys = jax.random.split(key, 8)
    sd = 0.02
    wq = jax.random.normal(keys[0], (D, D), jnp.float32) * sd
    wk = jax.random.normal(keys[1], (D, D), jnp.float32) * sd
    wv = jax.random.normal(keys[2], (D, D), jnp.float32) * sd
    wo = jax.random.normal(keys[3], (D, D), jnp.float32) * sd
    bq = jnp.zeros((1, D), jnp.float32)
    bk = jnp.zeros((1, D), jnp.float32)
    bv = jnp.zeros((1, D), jnp.float32)
    bo = jnp.zeros((1, D), jnp.float32)
    g1 = jnp.ones((1, D), jnp.float32)
    be1 = jnp.zeros((1, D), jnp.float32)
    w1 = jax.random.normal(keys[4], (D, F), jnp.float32) * sd
    bf1 = jnp.zeros((1, F), jnp.float32)
    w2 = jax.random.normal(keys[5], (F, D), jnp.float32) * sd
    bf2 = jnp.zeros((1, D), jnp.float32)
    g2 = jnp.ones((1, D), jnp.float32)
    be2 = jnp.zeros((1, D), jnp.float32)
    return (wq, bq, wk, bk, wv, bv, wo, bo, g1, be1, w1, bf1, w2, bf2, g2, be2)


if __name__ == "__main__":
    # TODO(synk): nn.Dropout has no kernel equivalent in eval; treated as identity (matches model.eval()).
    key = jax.random.PRNGKey(0)
    kx, kp, km = jax.random.split(key, 3)
    x = jax.random.normal(kx, (B, S, D), jnp.float32)
    # padding mask: last two positions of batch element 1 are masked out
    mask = jnp.ones((B, S), jnp.float32).at[1, -2:].set(0.0)
    params = make_params(kp)

    out = encoder_layer(x, mask, params)
    out = jax.block_until_ready(out)

    ref = reference(x, mask, params)
    # slightly loose tolerance: softmax denominator uses the EUP approximate reciprocal
    np.testing.assert_allclose(np.asarray(out), np.asarray(ref), rtol=2e-3, atol=2e-3)
    print("KERNEL_OK")
</pallas_src>

<mosaic_0001>
module attributes {stable_mosaic.version = 11 : i64} {
  func.func @encoder_layer_kernel(%arg0: i32, %arg1: memref<16x32xf32, #tpu.memory_space<vmem>>, %arg2: memref<16x16xf32, #tpu.memory_space<vmem>>, %arg3: memref<32x96xf32, #tpu.memory_space<vmem>>, %arg4: memref<1x96xf32, #tpu.memory_space<vmem>>, %arg5: memref<32x32xf32, #tpu.memory_space<vmem>>, %arg6: memref<32x64xf32, #tpu.memory_space<vmem>>, %arg7: memref<1x64xf32, #tpu.memory_space<vmem>>, %arg8: memref<64x32xf32, #tpu.memory_space<vmem>>, %arg9: memref<8x32xf32, #tpu.memory_space<vmem>>, %arg10: memref<16x32xf32, #tpu.memory_space<vmem>>) attributes {dimension_semantics = [#tpu.dimension_semantics<arbitrary>], iteration_bounds = array<i64: 1>, scalar_prefetch = 0 : i64, scratch_operands = 0 : i64, tpu.core_type = #tpu.core_type<tc>, window_params = [{pipeline_mode = #tpu.pipeline_mode<synchronous>, transform_indices = @transform_0, window_bounds = array<i64: 16, 32>}, {pipeline_mode = #tpu.pipeline_mode<synchronous>, transform_indices = @transform_1, window_bounds = array<i64: 16, 16>}, {pipeline_mode = #tpu.pipeline_mode<synchronous>, transform_indices = @transform_2, window_bounds = array<i64: 32, 96>}, {pipeline_mode = #tpu.pipeline_mode<synchronous>, transform_indices = @transform_3, window_bounds = array<i64: 1, 96>}, {pipeline_mode = #tpu.pipeline_mode<synchronous>, transform_indices = @transform_4, window_bounds = array<i64: 32, 32>}, {pipeline_mode = #tpu.pipeline_mode<synchronous>, transform_indices = @transform_5, window_bounds = array<i64: 32, 64>}, {pipeline_mode = #tpu.pipeline_mode<synchronous>, transform_indices = @transform_6, window_bounds = array<i64: 1, 64>}, {pipeline_mode = #tpu.pipeline_mode<synchronous>, transform_indices = @transform_7, window_bounds = array<i64: 64, 32>}, {pipeline_mode = #tpu.pipeline_mode<synchronous>, transform_indices = @transform_8, window_bounds = array<i64: 8, 32>}, {pipeline_mode = #tpu.pipeline_mode<synchronous>, transform_indices = @transform_9, window_bounds = array<i64: 16, 32>}]} {
    %c0 = arith.constant 0 : index
    %c0_0 = arith.constant 0 : index
    %0 = vector.load %arg1[%c0, %c0_0] : memref<16x32xf32, #tpu.memory_space<vmem>>, vector<16x32xf32>
    %c0_1 = arith.constant 0 : index
    %c0_2 = arith.constant 0 : index
    %1 = vector.load %arg2[%c0_1, %c0_2] : memref<16x16xf32, #tpu.memory_space<vmem>>, vector<16x16xf32>
    %c0_3 = arith.constant 0 : index
    %c0_4 = arith.constant 0 : index
    %2 = vector.load %arg3[%c0_3, %c0_4] : memref<32x96xf32, #tpu.memory_space<vmem>>, vector<32x96xf32>
    %cst = arith.constant dense<0.000000e+00> : vector<16x96xf32>
    %3 = tpu.matmul %0, %2, %cst {dimension_numbers = #tpu.dot_dimension_numbers<[1], [0], [0], [1], [0, 0, 1, 1], [], []>} : vector<16x32xf32>, vector<32x96xf32>, vector<16x96xf32> -> vector<16x96xf32>
    %c0_5 = arith.constant 0 : index
    %c0_6 = arith.constant 0 : index
    %4 = vector.load %arg4[%c0_5, %c0_6] : memref<1x96xf32, #tpu.memory_space<vmem>>, vector<1x96xf32>
    %5 = vector.broadcast %4 : vector<1x96xf32> to vector<16x96xf32>
    %6 = arith.addf %3, %5 : vector<16x96xf32>
    %7 = vector.extract_strided_slice %6 {offsets = [0, 0], sizes = [16, 32], strides = [1, 1]} : vector<16x96xf32> to vector<16x32xf32>
    %8 = vector.extract_strided_slice %6 {offsets = [0, 32], sizes = [16, 32], strides = [1, 1]} : vector<16x96xf32> to vector<16x32xf32>
    %9 = vector.extract_strided_slice %6 {offsets = [0, 64], sizes = [16, 32], strides = [1, 1]} : vector<16x96xf32> to vector<16x32xf32>
    %10 = vector.extract_strided_slice %7 {offsets = [0, 0], sizes = [16, 8], strides = [1, 1]} : vector<16x32xf32> to vector<16x8xf32>
    %11 = vector.extract_strided_slice %8 {offsets = [0, 0], sizes = [16, 8], strides = [1, 1]} : vector<16x32xf32> to vector<16x8xf32>
    %12 = vector.extract_strided_slice %9 {offsets = [0, 0], sizes = [16, 8], strides = [1, 1]} : vector<16x32xf32> to vector<16x8xf32>
    %cst_7 = arith.constant dense<0.000000e+00> : vector<16x16xf32>
    %13 = tpu.matmul %10, %11, %cst_7 {dimension_numbers = #tpu.dot_dimension_numbers<[1], [1], [0], [0], [0, 0, 1, 0], [], []>} : vector<16x8xf32>, vector<16x8xf32>, vector<16x16xf32> -> vector<16x16xf32>
    %14 = arith.addf %13, %1 : vector<16x16xf32>
    %cst_8 = arith.constant dense<0xFF800000> : vector<16xf32>
    %15 = vector.multi_reduction <maximumf>, %14, %cst_8 [1] : vector<16x16xf32> to vector<16xf32>
    %16 = vector.shape_cast %15 : vector<16xf32> to vector<16x1xf32>
    %17 = vector.broadcast %16 : vector<16x1xf32> to vector<16x16xf32>
    %18 = arith.subf %14, %17 : vector<16x16xf32>
    %19 = math.exp %18 : vector<16x16xf32>
    %cst_9 = arith.constant dense<0.000000e+00> : vector<16xf32>
    %20 = vector.multi_reduction <add>, %19, %cst_9 [1] : vector<16x16xf32> to vector<16xf32>
    %21 = vector.shape_cast %20 : vector<16xf32> to vector<16x1xf32>
    %22 = tpu.reciprocal %21 {approx = true} : vector<16x1xf32> -> vector<16x1xf32>
    %23 = vector.broadcast %22 : vector<16x1xf32> to vector<16x16xf32>
    %24 = arith.mulf %19, %23 : vector<16x16xf32>
    %cst_10 = arith.constant dense<0.000000e+00> : vector<16x8xf32>
    %25 = tpu.matmul %24, %12, %cst_10 {dimension_numbers = #tpu.dot_dimension_numbers<[1], [0], [0], [1], [0, 0, 1, 1], [], []>} : vector<16x16xf32>, vector<16x8xf32>, vector<16x8xf32> -> vector<16x8xf32>
    %26 = vector.extract_strided_slice %7 {offsets = [0, 8], sizes = [16, 8], strides = [1, 1]} : vector<16x32xf32> to vector<16x8xf32>
    %27 = vector.extract_strided_slice %8 {offsets = [0, 8], sizes = [16, 8], strides = [1, 1]} : vector<16x32xf32> to vector<16x8xf32>
    %28 = vector.extract_strided_slice %9 {offsets = [0, 8], sizes = [16, 8], strides = [1, 1]} : vector<16x32xf32> to vector<16x8xf32>
    %cst_11 = arith.constant dense<0.000000e+00> : vector<16x16xf32>
    %29 = tpu.matmul %26, %27, %cst_11 {dimension_numbers = #tpu.dot_dimension_numbers<[1], [1], [0], [0], [0, 0, 1, 0], [], []>} : vector<16x8xf32>, vector<16x8xf32>, vector<16x16xf32> -> vector<16x16xf32>
    %30 = arith.addf %29, %1 : vector<16x16xf32>
    %cst_12 = arith.constant dense<0xFF800000> : vector<16xf32>
    %31 = vector.multi_reduction <maximumf>, %30, %cst_12 [1] : vector<16x16xf32> to vector<16xf32>
    %32 = vector.shape_cast %31 : vector<16xf32> to vector<16x1xf32>
    %33 = vector.broadcast %32 : vector<16x1xf32> to vector<16x16xf32>
    %34 = arith.subf %30, %33 : vector<16x16xf32>
    %35 = math.exp %34 : vector<16x16xf32>
    %cst_13 = arith.constant dense<0.000000e+00> : vector<16xf32>
    %36 = vector.multi_reduction <add>, %35, %cst_13 [1] : vector<16x16xf32> to vector<16xf32>
    %37 = vector.shape_cast %36 : vector<16xf32> to vector<16x1xf32>
    %38 = tpu.reciprocal %37 {approx = true} : vector<16x1xf32> -> vector<16x1xf32>
    %39 = vector.broadcast %38 : vector<16x1xf32> to vector<16x16xf32>
    %40 = arith.mulf %35, %39 : vector<16x16xf32>
    %cst_14 = arith.constant dense<0.000000e+00> : vector<16x8xf32>
    %41 = tpu.matmul %40, %28, %cst_14 {dimension_numbers = #tpu.dot_dimension_numbers<[1], [0], [0], [1], [0, 0, 1, 1], [], []>} : vector<16x16xf32>, vector<16x8xf32>, vector<16x8xf32> -> vector<16x8xf32>
    %42 = vector.extract_strided_slice %7 {offsets = [0, 16], sizes = [16, 8], strides = [1, 1]} : vector<16x32xf32> to vector<16x8xf32>
    %43 = vector.extract_strided_slice %8 {offsets = [0, 16], sizes = [16, 8], strides = [1, 1]} : vector<16x32xf32> to vector<16x8xf32>
    %44 = vector.extract_strided_slice %9 {offsets = [0, 16], sizes = [16, 8], strides = [1, 1]} : vector<16x32xf32> to vector<16x8xf32>
    %cst_15 = arith.constant dense<0.000000e+00> : vector<16x16xf32>
    %45 = tpu.matmul %42, %43, %cst_15 {dimension_numbers = #tpu.dot_dimension_numbers<[1], [1], [0], [0], [0, 0, 1, 0], [], []>} : vector<16x8xf32>, vector<16x8xf32>, vector<16x16xf32> -> vector<16x16xf32>
    %46 = arith.addf %45, %1 : vector<16x16xf32>
    %cst_16 = arith.constant dense<0xFF800000> : vector<16xf32>
    %47 = vector.multi_reduction <maximumf>, %46, %cst_16 [1] : vector<16x16xf32> to vector<16xf32>
    %48 = vector.shape_cast %47 : vector<16xf32> to vector<16x1xf32>
    %49 = vector.broadcast %48 : vector<16x1xf32> to vector<16x16xf32>
    %50 = arith.subf %46, %49 : vector<16x16xf32>
    %51 = math.exp %50 : vector<16x16xf32>
    %cst_17 = arith.constant dense<0.000000e+00> : vector<16xf32>
    %52 = vector.multi_reduction <add>, %51, %cst_17 [1] : vector<16x16xf32> to vector<16xf32>
    %53 = vector.shape_cast %52 : vector<16xf32> to vector<16x1xf32>
    %54 = tpu.reciprocal %53 {approx = true} : vector<16x1xf32> -> vector<16x1xf32>
    %55 = vector.broadcast %54 : vector<16x1xf32> to vector<16x16xf32>
    %56 = arith.mulf %51, %55 : vector<16x16xf32>
    %cst_18 = arith.constant dense<0.000000e+00> : vector<16x8xf32>
    %57 = tpu.matmul %56, %44, %cst_18 {dimension_numbers = #tpu.dot_dimension_numbers<[1], [0], [0], [1], [0, 0, 1, 1], [], []>} : vector<16x16xf32>, vector<16x8xf32>, vector<16x8xf32> -> vector<16x8xf32>
    %58 = vector.extract_strided_slice %7 {offsets = [0, 24], sizes = [16, 8], strides = [1, 1]} : vector<16x32xf32> to vector<16x8xf32>
    %59 = vector.extract_strided_slice %8 {offsets = [0, 24], sizes = [16, 8], strides = [1, 1]} : vector<16x32xf32> to vector<16x8xf32>
    %60 = vector.extract_strided_slice %9 {offsets = [0, 24], sizes = [16, 8], strides = [1, 1]} : vector<16x32xf32> to vector<16x8xf32>
    %cst_19 = arith.constant dense<0.000000e+00> : vector<16x16xf32>
    %61 = tpu.matmul %58, %59, %cst_19 {dimension_numbers = #tpu.dot_dimension_numbers<[1], [1], [0], [0], [0, 0, 1, 0], [], []>} : vector<16x8xf32>, vector<16x8xf32>, vector<16x16xf32> -> vector<16x16xf32>
    %62 = arith.addf %61, %1 : vector<16x16xf32>
    %cst_20 = arith.constant dense<0xFF800000> : vector<16xf32>
    %63 = vector.multi_reduction <maximumf>, %62, %cst_20 [1] : vector<16x16xf32> to vector<16xf32>
    %64 = vector.shape_cast %63 : vector<16xf32> to vector<16x1xf32>
    %65 = vector.broadcast %64 : vector<16x1xf32> to vector<16x16xf32>
    %66 = arith.subf %62, %65 : vector<16x16xf32>
    %67 = math.exp %66 : vector<16x16xf32>
    %cst_21 = arith.constant dense<0.000000e+00> : vector<16xf32>
    %68 = vector.multi_reduction <add>, %67, %cst_21 [1] : vector<16x16xf32> to vector<16xf32>
    %69 = vector.shape_cast %68 : vector<16xf32> to vector<16x1xf32>
    %70 = tpu.reciprocal %69 {approx = true} : vector<16x1xf32> -> vector<16x1xf32>
    %71 = vector.broadcast %70 : vector<16x1xf32> to vector<16x16xf32>
    %72 = arith.mulf %67, %71 : vector<16x16xf32>
    %cst_22 = arith.constant dense<0.000000e+00> : vector<16x8xf32>
    %73 = tpu.matmul %72, %60, %cst_22 {dimension_numbers = #tpu.dot_dimension_numbers<[1], [0], [0], [1], [0, 0, 1, 1], [], []>} : vector<16x16xf32>, vector<16x8xf32>, vector<16x8xf32> -> vector<16x8xf32>
    %74 = tpu.concatenate %25, %41, %57, %73 in 1 : vector<16x8xf32>, vector<16x8xf32>, vector<16x8xf32>, vector<16x8xf32> -> vector<16x32xf32>
    %c0_23 = arith.constant 0 : index
    %c0_24 = arith.constant 0 : index
    %75 = vector.load %arg9[%c0_23, %c0_24] : memref<8x32xf32, #tpu.memory_space<vmem>>, vector<1x32xf32>
    %c0_25 = arith.constant 0 : index
    %c0_26 = arith.constant 0 : index
    %76 = vector.load %arg5[%c0_25, %c0_26] : memref<32x32xf32, #tpu.memory_space<vmem>>, vector<32x32xf32>
    %cst_27 = arith.constant dense<0.000000e+00> : vector<16x32xf32>
    %77 = tpu.matmul %74, %76, %cst_27 {dimension_numbers = #tpu.dot_dimension_numbers<[1], [0], [0], [1], [0, 0, 1, 1], [], []>} : vector<16x32xf32>, vector<32x32xf32>, vector<16x32xf32> -> vector<16x32xf32>
    %78 = vector.broadcast %75 : vector<1x32xf32> to vector<16x32xf32>
    %79 = arith.addf %77, %78 : vector<16x32xf32>
    %c1 = arith.constant 1 : index
    %c0_28 = arith.constant 0 : index
    %80 = vector.load %arg9[%c1, %c0_28] : memref<8x32xf32, #tpu.memory_space<vmem>>, vector<1x32xf32>
    %c2 = arith.constant 2 : index
    %c0_29 = arith.constant 0 : index
    %81 = vector.load %arg9[%c2, %c0_29] : memref<8x32xf32, #tpu.memory_space<vmem>>, vector<1x32xf32>
    %82 = arith.addf %0, %79 : vector<16x32xf32>
    %cst_30 = arith.constant dense<0.000000e+00> : vector<16xf32>
    %83 = vector.multi_reduction <add>, %82, %cst_30 [1] : vector<16x32xf32> to vector<16xf32>
    %84 = vector.shape_cast %83 : vector<16xf32> to vector<16x1xf32>
    %cst_31 = arith.constant 3.200000e+01 : f32
    %85 = vector.broadcast %cst_31 : f32 to vector<16x1xf32>
    %86 = arith.divf %84, %85 : vector<16x1xf32>
    %87 = vector.broadcast %86 : vector<16x1xf32> to vector<16x32xf32>
    %88 = arith.subf %82, %87 : vector<16x32xf32>
    %89 = vector.broadcast %86 : vector<16x1xf32> to vector<16x32xf32>
    %90 = arith.subf %82, %89 : vector<16x32xf32>
    %91 = arith.mulf %88, %90 : vector<16x32xf32>
    %cst_32 = arith.constant dense<0.000000e+00> : vector<16xf32>
    %92 = vector.multi_reduction <add>, %91, %cst_32 [1] : vector<16x32xf32> to vector<16xf32>
    %93 = vector.shape_cast %92 : vector<16xf32> to vector<16x1xf32>
    %cst_33 = arith.constant 3.200000e+01 : f32
    %94 = vector.broadcast %cst_33 : f32 to vector<16x1xf32>
    %95 = arith.divf %93, %94 : vector<16x1xf32>
    %96 = vector.broadcast %86 : vector<16x1xf32> to vector<16x32xf32>
    %97 = arith.subf %82, %96 : vector<16x32xf32>
    %cst_34 = arith.constant 9.99999974E-6 : f32
    %98 = vector.broadcast %cst_34 : f32 to vector<16x1xf32>
    %99 = arith.addf %95, %98 : vector<16x1xf32>
    %100 = math.rsqrt %99 : vector<16x1xf32>
    %101 = vector.broadcast %100 : vector<16x1xf32> to vector<16x32xf32>
    %102 = arith.mulf %97, %101 : vector<16x32xf32>
    %103 = vector.broadcast %80 : vector<1x32xf32> to vector<16x32xf32>
    %104 = arith.mulf %102, %103 : vector<16x32xf32>
    %105 = vector.broadcast %81 : vector<1x32xf32> to vector<16x32xf32>
    %106 = arith.addf %104, %105 : vector<16x32xf32>
    %c0_35 = arith.constant 0 : index
    %c0_36 = arith.constant 0 : index
    %107 = vector.load %arg6[%c0_35, %c0_36] : memref<32x64xf32, #tpu.memory_space<vmem>>, vector<32x64xf32>
    %cst_37 = arith.constant dense<0.000000e+00> : vector<16x64xf32>
    %108 = tpu.matmul %106, %107, %cst_37 {dimension_numbers = #tpu.dot_dimension_numbers<[1], [0], [0], [1], [0, 0, 1, 1], [], []>} : vector<16x32xf32>, vector<32x64xf32>, vector<16x64xf32> -> vector<16x64xf32>
    %c0_38 = arith.constant 0 : index
    %c0_39 = arith.constant 0 : index
    %109 = vector.load %arg7[%c0_38, %c0_39] : memref<1x64xf32, #tpu.memory_space<vmem>>, vector<1x64xf32>
    %110 = vector.broadcast %109 : vector<1x64xf32> to vector<16x64xf32>
    %111 = arith.addf %108, %110 : vector<16x64xf32>
    %cst_40 = arith.constant 0.000000e+00 : f32
    %112 = vector.broadcast %cst_40 : f32 to vector<16x64xf32>
    %113 = arith.maximumf %111, %112 : vector<16x64xf32>
    %c3 = arith.constant 3 : index
    %c0_41 = arith.constant 0 : index
    %114 = vector.load %arg9[%c3, %c0_41] : memref<8x32xf32, #tpu.memory_space<vmem>>, vector<1x32xf32>
    %c0_42 = arith.constant 0 : index
    %c0_43 = arith.constant 0 : index
    %115 = vector.load %arg8[%c0_42, %c0_43] : memref<64x32xf32, #tpu.memory_space<vmem>>, vector<64x32xf32>
    %cst_44 = arith.constant dense<0.000000e+00> : vector<16x32xf32>
    %116 = tpu.matmul %113, %115, %cst_44 {dimension_numbers = #tpu.dot_dimension_numbers<[1], [0], [0], [1], [0, 0, 1, 1], [], []>} : vector<16x64xf32>, vector<64x32xf32>, vector<16x32xf32> -> vector<16x32xf32>
    %117 = vector.broadcast %114 : vector<1x32xf32> to vector<16x32xf32>
    %118 = arith.addf %116, %117 : vector<16x32xf32>
    %c4 = arith.constant 4 : index
    %c0_45 = arith.constant 0 : index
    %119 = vector.load %arg9[%c4, %c0_45] : memref<8x32xf32, #tpu.memory_space<vmem>>, vector<1x32xf32>
    %c5 = arith.constant 5 : index
    %c0_46 = arith.constant 0 : index
    %120 = vector.load %arg9[%c5, %c0_46] : memref<8x32xf32, #tpu.memory_space<vmem>>, vector<1x32xf32>
    %121 = arith.addf %106, %118 : vector<16x32xf32>
    %cst_47 = arith.constant dense<0.000000e+00> : vector<16xf32>
    %122 = vector.multi_reduction <add>, %121, %cst_47 [1] : vector<16x32xf32> to vector<16xf32>
    %123 = vector.shape_cast %122 : vector<16xf32> to vector<16x1xf32>
    %cst_48 = arith.constant 3.200000e+01 : f32
    %124 = vector.broadcast %cst_48 : f32 to vector<16x1xf32>
    %125 = arith.divf %123, %124 : vector<16x1xf32>
    %126 = vector.broadcast %125 : vector<16x1xf32> to vector<16x32xf32>
    %127 = arith.subf %121, %126 : vector<16x32xf32>
    %128 = vector.broadcast %125 : vector<16x1xf32> to vector<16x32xf32>
    %129 = arith.subf %121, %128 : vector<16x32xf32>
    %130 = arith.mulf %127, %129 : vector<16x32xf32>
    %cst_49 = arith.constant dense<0.000000e+00> : vector<16xf32>
    %131 = vector.multi_reduction <add>, %130, %cst_49 [1] : vector<16x32xf32> to vector<16xf32>
    %132 = vector.shape_cast %131 : vector<16xf32> to vector<16x1xf32>
    %cst_50 = arith.constant 3.200000e+01 : f32
    %133 = vector.broadcast %cst_50 : f32 to vector<16x1xf32>
    %134 = arith.divf %132, %133 : vector<16x1xf32>
    %135 = vector.broadcast %125 : vector<16x1xf32> to vector<16x32xf32>
    %136 = arith.subf %121, %135 : vector<16x32xf32>
    %cst_51 = arith.constant 9.99999974E-6 : f32
    %137 = vector.broadcast %cst_51 : f32 to vector<16x1xf32>
    %138 = arith.addf %134, %137 : vector<16x1xf32>
    %139 = math.rsqrt %138 : vector<16x1xf32>
    %140 = vector.broadcast %139 : vector<16x1xf32> to vector<16x32xf32>
    %141 = arith.mulf %136, %140 : vector<16x32xf32>
    %142 = vector.broadcast %119 : vector<1x32xf32> to vector<16x32xf32>
    %143 = arith.mulf %141, %142 : vector<16x32xf32>
    %144 = vector.broadcast %120 : vector<1x32xf32> to vector<16x32xf32>
    %145 = arith.addf %143, %144 : vector<16x32xf32>
    %c0_52 = arith.constant 0 : index
    %c0_53 = arith.constant 0 : index
    %146 = vector.load %arg10[%c0_52, %c0_53] : memref<16x32xf32, #tpu.memory_space<vmem>>, vector<16x32xf32>
    tpu.vector_store %arg10[%c0_52, %c0_53], %145 {strides = array<i32>} : memref<16x32xf32, #tpu.memory_space<vmem>>, vector<16x32xf32>,
    return
  }
  func.func @transform_0(%arg0: i32) -> (i32, i32) {
    %c0_i32 = arith.constant 0 : i32
    %c0_i32_0 = arith.constant 0 : i32
    %c0_i32_1 = arith.constant 0 : i32
    return %c0_i32, %c0_i32_0 : i32, i32
  }
  func.func @transform_1(%arg0: i32) -> (i32, i32) {
    %c0_i32 = arith.constant 0 : i32
    %c0_i32_0 = arith.constant 0 : i32
    %c0_i32_1 = arith.constant 0 : i32
    return %c0_i32, %c0_i32_0 : i32, i32
  }
  func.func @transform_2(%arg0: i32) -> (i32, i32) {
    %c0_i32 = arith.constant 0 : i32
    %c0_i32_0 = arith.constant 0 : i32
    %c0_i32_1 = arith.constant 0 : i32
    return %c0_i32, %c0_i32_0 : i32, i32
  }
  func.func @transform_3(%arg0: i32) -> (i32, i32) {
    %c0_i32 = arith.constant 0 : i32
    %c0_i32_0 = arith.constant 0 : i32
    %c0_i32_1 = arith.constant 0 : i32
    return %c0_i32, %c0_i32_0 : i32, i32
  }
  func.func @transform_4(%arg0: i32) -> (i32, i32) {
    %c0_i32 = arith.constant 0 : i32
    %c0_i32_0 = arith.constant 0 : i32
    %c0_i32_1 = arith.constant 0 : i32
    return %c0_i32, %c0_i32_0 : i32, i32
  }
  func.func @transform_5(%arg0: i32) -> (i32, i32) {
    %c0_i32 = arith.constant 0 : i32
    %c0_i32_0 = arith.constant 0 : i32
    %c0_i32_1 = arith.constant 0 : i32
    return %c0_i32, %c0_i32_0 : i32, i32
  }
  func.func @transform_6(%arg0: i32) -> (i32, i32) {
    %c0_i32 = arith.constant 0 : i32
    %c0_i32_0 = arith.constant 0 : i32
    %c0_i32_1 = arith.constant 0 : i32
    return %c0_i32, %c0_i32_0 : i32, i32
  }
  func.func @transform_7(%arg0: i32) -> (i32, i32) {
    %c0_i32 = arith.constant 0 : i32
    %c0_i32_0 = arith.constant 0 : i32
    %c0_i32_1 = arith.constant 0 : i32
    return %c0_i32, %c0_i32_0 : i32, i32
  }
  func.func @transform_8(%arg0: i32) -> (i32, i32) {
    %c0_i32 = arith.constant 0 : i32
    %c0_i32_0 = arith.constant 0 : i32
    %c0_i32_1 = arith.constant 0 : i32
    return %c0_i32, %c0_i32_0 : i32, i32
  }
  func.func @transform_9(%arg0: i32) -> (i32, i32) {
    %c0_i32 = arith.constant 0 : i32
    %c0_i32_0 = arith.constant 0 : i32
    %c0_i32_1 = arith.constant 0 : i32
    return %c0_i32, %c0_i32_0 : i32, i32
  }
}

</mosaic_0001>

<llo_original>
// kernel: tpu_custom_call.1
$region0: #{tpu_custom_call.1}
  #allocation0 [shape = 'u32[]', space=smem, size = 0x4, offset = 0x4, fixed_abs, tag = 'smem constant byte address 0x4 - core index']
  #allocation1 [shape = 'u32[72,128]{1,0:T(1,128)}', space=vmem, size = 0x9000, scoped, tag = 'internal scratch']
  %s0 = inlined_call_operand.hbm [shape: f32[16,32], index: 0, kind: input, shape index: {}]
  %s1 = inlined_call_operand.hbm [shape: f32[16,16], index: 1, kind: input, shape index: {}]
  %s2 = inlined_call_operand.vmem [shape: f32[32,96], index: 2, kind: input, shape index: {}]
  %s3 = inlined_call_operand.vmem [shape: f32[1,96], index: 3, kind: input, shape index: {}]
  %s4 = inlined_call_operand.vmem [shape: f32[32,32], index: 4, kind: input, shape index: {}]
  %s5 = inlined_call_operand.vmem [shape: f32[32,64], index: 5, kind: input, shape index: {}]
  %s6 = inlined_call_operand.vmem [shape: f32[1,64], index: 6, kind: input, shape index: {}]
  %s7 = inlined_call_operand.vmem [shape: f32[64,32], index: 7, kind: input, shape index: {}]
  %s8 = inlined_call_operand.hbm [shape: f32[8,32], index: 8, kind: input, shape index: {}]
  %s9 = inlined_call_operand.hbm [shape: f32[16,32], index: 9, kind: output, shape index: {}]
  %s10 = sld [smem:[#allocation0]]
  $region58: #{tpu_custom_call.1} parent=0
    _
  %s12 = ssub.s32 1, %s10
  %s13 = scalar_select 0, %s12, %s10
  $region1: #{tpu_custom_call.1} parent=0
    #allocation2 [shape = 'u8[8192]{0}', space=vmem, size = 0x2000, scoped, tag = 'input window, operand 0, single buffered']
    #allocation3 [shape = 's32[1]{0}', space=sflag, size = 0x4, scoped, tag = 'scoped memory for tpu_custom_call.1']
    #allocation4 [shape = 's32[1]{0}', space=sflag, size = 0x4, scoped, tag = 'scoped memory for tpu_custom_call.1']
    #allocation5 [shape = 'u8[8192]{0}', space=vmem, size = 0x2000, scoped, tag = 'input window, operand 1, single buffered']
    #allocation6 [shape = 's32[1]{0}', space=sflag, size = 0x4, scoped, tag = 'scoped memory for tpu_custom_call.1']
    #allocation7 [shape = 'u8[4096]{0}', space=vmem, size = 0x1000, scoped, tag = 'input window, operand 8, single buffered']
    #allocation8 [shape = 'u8[8192]{0}', space=vmem, size = 0x2000, scoped, tag = 'output window, operand 0, single buffered']
    %14 = vsyncpa [#allocation3], 0
    %15 = vsyncpa [#allocation6], 0
    %16 = vsyncpa [#allocation4], 0
    // Predicated region
    $region2: #{tpu_custom_call.1} parent=1 // pred_check
      _
    $region3: #{tpu_custom_call.1} parent=1 // pred_check_branch
      %18 = sbr.rel (0) target = $region5
    $region4: #{tpu_custom_call.1} parent=1 // pred_region
      %20 = vsyncadd [#allocation3], 0
      %s21 = sshll.u32 %s0, 4
      %s22 = int_to_ptr.hbm [resolvable:$true] %s21
      %s23 = sshll.u32 [#allocation2], 4
      %s24 = int_to_ptr.vmem [resolvable:$true] %s23
      %29 = dma.hbm_to_vmem [thread:$0]  %s22, 256, %s24, [#allocation3], 128, 128, 8
    $region5: #{tpu_custom_call.1} parent=1 // pred_fallthru
      _
    // Predicated region
    $region6: #{tpu_custom_call.1} parent=1 // pred_check
      _
    $region7: #{tpu_custom_call.1} parent=1 // pred_check_branch
      %31 = sbr.rel (0) target = $region9
    $region8: #{tpu_custom_call.1} parent=1 // pred_region
      %33 = vsyncadd [#allocation6], 0
      %s34 = sshll.u32 %s1, 4
      %s35 = int_to_ptr.hbm [resolvable:$true] %s34
      %s36 = sshll.u32 [#allocation5], 4
      %s37 = int_to_ptr.vmem [resolvable:$true] %s36
      %42 = dma.hbm_to_vmem [thread:$0]  %s35, 256, %s37, [#allocation6], 128, 128, 8
    $region9: #{tpu_custom_call.1} parent=1 // pred_fallthru
      _
    // Predicated region
    $region10: #{tpu_custom_call.1} parent=1 // pred_check
      _
    $region11: #{tpu_custom_call.1} parent=1 // pred_check_branch
      %44 = sbr.rel (0) target = $region13
    $region12: #{tpu_custom_call.1} parent=1 // pred_region
      _
    $region13: #{tpu_custom_call.1} parent=1 // pred_fallthru
      _
    // Predicated region
    $region14: #{tpu_custom_call.1} parent=1 // pred_check
      _
    $region15: #{tpu_custom_call.1} parent=1 // pred_check_branch
      %46 = sbr.rel (0) target = $region17
    $region16: #{tpu_custom_call.1} parent=1 // pred_region
      _
    $region17: #{tpu_custom_call.1} parent=1 // pred_fallthru
      _
    // Predicated region
    $region18: #{tpu_custom_call.1} parent=1 // pred_check
      _
    $region19: #{tpu_custom_call.1} parent=1 // pred_check_branch
      %48 = sbr.rel (0) target = $region21
    $region20: #{tpu_custom_call.1} parent=1 // pred_region
      _
    $region21: #{tpu_custom_call.1} parent=1 // pred_fallthru
      _
    // Predicated region
    $region22: #{tpu_custom_call.1} parent=1 // pred_check
      _
    $region23: #{tpu_custom_call.1} parent=1 // pred_check_branch
      %50 = sbr.rel (0) target = $region25
    $region24: #{tpu_custom_call.1} parent=1 // pred_region
      _
    $region25: #{tpu_custom_call.1} parent=1 // pred_fallthru
      _
    // Predicated region
    $region26: #{tpu_custom_call.1} parent=1 // pred_check
      _
    $region27: #{tpu_custom_call.1} parent=1 // pred_check_branch
      %52 = sbr.rel (0) target = $region29
    $region28: #{tpu_custom_call.1} parent=1 // pred_region
      _
    $region29: #{tpu_custom_call.1} parent=1 // pred_fallthru
      _
    // Predicated region
    $region30: #{tpu_custom_call.1} parent=1 // pred_check
      _
    $region31: #{tpu_custom_call.1} parent=1 // pred_check_branch
      %54 = sbr.rel (0) target = $region33
    $region32: #{tpu_custom_call.1} parent=1 // pred_region
      _
    $region33: #{tpu_custom_call.1} parent=1 // pred_fallthru
      _
    // Predicated region
    $region34: #{tpu_custom_call.1} parent=1 // pred_check
      _
    $region35: #{tpu_custom_call.1} parent=1 // pred_check_branch
      %56 = sbr.rel (0) target = $region37
    $region36: #{tpu_custom_call.1} parent=1 // pred_region
      %58 = vsyncadd [#allocation6], 0
      %s60 = sshll.u32 %s8, 4
      %s61 = int_to_ptr.hbm [resolvable:$true] %s60
      %s62 = sshll.u32 [#allocation7], 4
      %s63 = int_to_ptr.vmem [resolvable:$true] %s62
      %65 = dma.hbm_to_vmem [thread:$0]  %s61, 128, %s63, [#allocation6]
    $region37: #{tpu_custom_call.1} parent=1 // pred_fallthru
      _
    // Predicated region
    $region38: #{tpu_custom_call.1} parent=1 // pred_check
      _
    $region39: #{tpu_custom_call.1} parent=1 // pred_check_branch
      %67 = sbr.rel (0) target = $region41
    $region40: #{tpu_custom_call.1} parent=1 // pred_region
      %69 = dma.done [#allocation3], 256
    $region41: #{tpu_custom_call.1} parent=1 // pred_fallthru
      _
    // Predicated region
    $region42: #{tpu_custom_call.1} parent=1 // pred_check
      _
    $region43: #{tpu_custom_call.1} parent=1 // pred_check_branch
      %71 = sbr.rel (0) target = $region45
    $region44: #{tpu_custom_call.1} parent=1 // pred_region
      %73 = dma.done [#allocation6], 256
    $region45: #{tpu_custom_call.1} parent=1 // pred_fallthru
      _
    // Predicated region
    $region46: #{tpu_custom_call.1} parent=1 // pred_check
      _
    $region47: #{tpu_custom_call.1} parent=1 // pred_check_branch
      %75 = sbr.rel (0) target = $region49
    $region48: #{tpu_custom_call.1} parent=1 // pred_region
      %77 = dma.done [#allocation6], 128
    $region49: #{tpu_custom_call.1} parent=1 // pred_fallthru
      _
    %v78 = vld [vmem:[#allocation2] sm:$0xff]
    %v79 = vld [vmem:[#allocation2 + $0x8] sm:$0xff]
    %v80 = vld [vmem:[#allocation5] sm:$0xff]
    %v81 = vld [vmem:[#allocation5 + $0x8] sm:$0xff]
    %v82 = vld [vmem:[%s2] sm:$0xff]
    %v83 = vld [vmem:[%s2 + $0x8] sm:$0xff]
    %v84 = vld [vmem:[%s2 + $0x10] sm:$0xff]
    %v85 = vld [vmem:[%s2 + $0x18] sm:$0xff]
    %v86 = vld [vmem:[%s3] sm:$0x1]
    %v88 = vperm.slane %v86, 0
    %vm90 = vcmask 261120
    %v92 = vsel %vm90, %v78, 0
    %v95 = vsel %vm90, %v79, 0
    %97 = vmatpush.msra.mxu0 0.0
    %98 = vmatpush.msra.mxu0 0.0
    %99 = vmatpush.msra.mxu0 0.0
    %100 = vmatpush.msra.mxu0 0.0
    %101 = vmatpush.msra.mxu0 0.0
    %102 = vmatpush.msra.mxu0 0.0
    %103 = vmatpush.msra.mxu0 0.0
    %104 = vmatpush.msra.mxu0 0.0
    %105 = vmatpush.msra.mxu0 0.0
    %106 = vmatpush.msra.mxu0 0.0
    %107 = vmatpush.msra.mxu0 0.0
    %108 = vmatpush.msra.mxu0 0.0
    %109 = vmatpush.msra.mxu0 %v85
    %110 = vmatpush.msra.mxu0 %v84
    %111 = vmatpush.msra.mxu0 %v83
    %112 = vmatpush.msra.mxu0 %v82
    %113 = vmatmul.f32.gmra.mxu0 %v92
    %v114 = vpop.f32.mrf.mxu0
    %v115 = vadd.f32 %v88, %v114
    %116 = vmatmul.f32.gmra.mxu0 %v95
    %v117 = vpop.f32.mrf.mxu0
    %v118 = vadd.f32 %v88, %v117
    %119 = vdwg.mxu0
    %122 = vrot.lane.b32.xlu0 %v115, 96
    %v123 = vpop.permute.xlu0 %122
    %124 = vrot.lane.b32.xlu0 %v118, 96
    %v125 = vpop.permute.xlu0 %124
    %vm126 = vcmask 64512
    %v127 = vsel %vm126, %v115, 0
    %v129 = vsel %vm126, %v118, 0
    %v131 = vsel %vm126, %v123, 0
    %v133 = vsel %vm126, %v125, 0
    %135 = vmatpush.xpose.msra.mxu0 0.0
    %136 = vmatpush.xpose.msra.mxu0 0.0
    %137 = vmatpush.xpose.msra.mxu0 0.0
    %138 = vmatpush.xpose.msra.mxu0 0.0
    %139 = vmatpush.xpose.msra.mxu0 0.0
    %140 = vmatpush.xpose.msra.mxu0 0.0
    %141 = vmatpush.xpose.msra.mxu0 0.0
    %142 = vmatpush.xpose.msra.mxu0 0.0
    %143 = vmatpush.xpose.msra.mxu0 0.0
    %144 = vmatpush.xpose.msra.mxu0 0.0
    %145 = vmatpush.xpose.msra.mxu0 0.0
    %146 = vmatpush.xpose.msra.mxu0 0.0
    %147 = vmatpush.xpose.msra.mxu0 0.0
    %148 = vmatpush.xpose.msra.mxu0 0.0
    %149 = vmatpush.xpose.msra.mxu0 %v133
    %150 = vmatpush.xpose.msra.mxu0 %v131
    %151 = vmatmul.f32.gmra.mxu0 %v127
    %v152 = vpop.f32.mrf.mxu0
    %v153 = vadd.f32 %v80, %v152
    %154 = vmatmul.f32.gmra.mxu0 %v129
    %v155 = vpop.f32.mrf.mxu0
    %v156 = vadd.f32 %v81, %v155
    %157 = vdwg.mxu0
    %vm158 = vcmask 130048
    %v159 = vsel %vm158, %v153, -inf
    %160 = vmax.xlane.f32.xlu0 %v159
    %v161 = vpop.xlane.xlu0 %160
    %v162 = vsel %vm158, %v156, -inf
    %163 = vmax.xlane.f32.xlu0 %v162
    %v164 = vpop.xlane.xlu0 %163
    %v165 = vsub.f32 %v153, %v161
    %v166 = vsub.f32 %v156, %v164
    %v167 = vmul.f32 %v165, 1.442695
    %v168 = vpow.pop %v167
    %v169 = vmul.f32 %v166, 1.442695
    %v170 = vpow.pop %v169
    %v171 = vsel %vm158, %v168, 0.0
    %172 = vadd.xlane.f32.xlu0 %v171
    %v173 = vpop.xlane.xlu0 %172
    %v174 = vsel %vm158, %v170, 0.0
    %175 = vadd.xlane.f32.xlu0 %v174
    %v176 = vpop.xlane.xlu0 %175
    %v177 = vrcp.pop %v173
    %v178 = vrcp.pop %v176
    %v179 = vmul.f32 %v168, %v177
    %v180 = vmul.f32 %v170, %v178
    %181 = vrot.lane.b32.xlu0 %v115, 64
    %v182 = vpop.permute.xlu0 %181
    %183 = vrot.lane.b32.xlu0 %v118, 64
    %v184 = vpop.permute.xlu0 %183
    %v188 = vsel %vm158, %v179, 0
    %v191 = vsel %vm158, %v180, 0
    %193 = vmatpush.msra.mxu0 0.0
    %194 = vmatpush.msra.mxu0 0.0
    %195 = vmatpush.msra.mxu0 0.0
    %196 = vmatpush.msra.mxu0 0.0
    %197 = vmatpush.msra.mxu0 0.0
    %198 = vmatpush.msra.mxu0 0.0
    %199 = vmatpush.msra.mxu0 0.0
    %200 = vmatpush.msra.mxu0 0.0
    %201 = vmatpush.msra.mxu0 0.0
    %202 = vmatpush.msra.mxu0 0.0
    %203 = vmatpush.msra.mxu0 0.0
    %204 = vmatpush.msra.mxu0 0.0
    %205 = vmatpush.msra.mxu0 0.0
    %206 = vmatpush.msra.mxu0 0.0
    %207 = vmatpush.msra.mxu0 %v184
    %208 = vmatpush.msra.mxu0 %v182
    %209 = vmatmul.f32.gmra.mxu0 %v188
    %v210 = vpop.f32.mrf.mxu0
    %v211 = vadd.f32 0.0, %v210
    %212 = vmatmul.f32.gmra.mxu0 %v191
    %v213 = vpop.f32.mrf.mxu0
    %v214 = vadd.f32 0.0, %v213
    %215 = vdwg.mxu0
    %216 = vrot.lane.b32.xlu0 %v115, 120
    %v217 = vpop.permute.xlu0 %216
    %218 = vrot.lane.b32.xlu0 %v118, 120
    %v219 = vpop.permute.xlu0 %218
    %220 = vrot.lane.b32.xlu0 %v115, 88
    %v221 = vpop.permute.xlu0 %220
    %222 = vrot.lane.b32.xlu0 %v118, 88
    %v223 = vpop.permute.xlu0 %222
    %v224 = vsel %vm126, %v217, 0
    %v226 = vsel %vm126, %v219, 0
    %v228 = vsel %vm126, %v221, 0
    %v230 = vsel %vm126, %v223, 0
    %232 = vmatpush.xpose.msra.mxu0 0.0
    %233 = vmatpush.xpose.msra.mxu0 0.0
    %234 = vmatpush.xpose.msra.mxu0 0.0
    %235 = vmatpush.xpose.msra.mxu0 0.0
    %236 = vmatpush.xpose.msra.mxu0 0.0
    %237 = vmatpush.xpose.msra.mxu0 0.0
    %238 = vmatpush.xpose.msra.mxu0 0.0
    %239 = vmatpush.xpose.msra.mxu0 0.0
    %240 = vmatpush.xpose.msra.mxu0 0.0
    %241 = vmatpush.xpose.msra.mxu0 0.0
    %242 = vmatpush.xpose.msra.mxu0 0.0
    %243 = vmatpush.xpose.msra.mxu0 0.0
    %244 = vmatpush.xpose.msra.mxu0 0.0
    %245 = vmatpush.xpose.msra.mxu0 0.0
    %246 = vmatpush.xpose.msra.mxu0 %v230
    %247 = vmatpush.xpose.msra.mxu0 %v228
    %248 = vmatmul.f32.gmra.mxu0 %v224
    %v249 = vpop.f32.mrf.mxu0
    %v250 = vadd.f32 %v80, %v249
    %251 = vmatmul.f32.gmra.mxu0 %v226
    %v252 = vpop.f32.mrf.mxu0
    %v253 = vadd.f32 %v81, %v252
    %254 = vdwg.mxu0
    %v255 = vsel %vm158, %v250, -inf
    %256 = vmax.xlane.f32.xlu0 %v255
    %v257 = vpop.xlane.xlu0 %256
    %v258 = vsel %vm158, %v253, -inf
    %259 = vmax.xlane.f32.xlu0 %v258
    %v260 = vpop.xlane.xlu0 %259
    %v261 = vsub.f32 %v250, %v257
    %v262 = vsub.f32 %v253, %v260
    %v263 = vmul.f32 %v261, 1.442695
    %v264 = vpow.pop %v263
    %v265 = vmul.f32 %v262, 1.442695
    %v266 = vpow.pop %v265
    %v267 = vsel %vm158, %v264, 0.0
    %268 = vadd.xlane.f32.xlu0 %v267
    %v269 = vpop.xlane.xlu0 %268
    %v270 = vsel %vm158, %v266, 0.0
    %271 = vadd.xlane.f32.xlu0 %v270
    %v272 = vpop.xlane.xlu0 %271
    %v273 = vrcp.pop %v269
    %v274 = vrcp.pop %v272
    %v275 = vmul.f32 %v264, %v273
    %v276 = vmul.f32 %v266, %v274
    %277 = vrot.lane.b32.xlu0 %v115, 56
    %v278 = vpop.permute.xlu0 %277
    %279 = vrot.lane.b32.xlu0 %v118, 56
    %v280 = vpop.permute.xlu0 %279
    %v284 = vsel %vm158, %v275, 0
    %v287 = vsel %vm158, %v276, 0
    %289 = vmatpush.msra.mxu0 0.0
    %290 = vmatpush.msra.mxu0 0.0
    %291 = vmatpush.msra.mxu0 0.0
    %292 = vmatpush.msra.mxu0 0.0
    %293 = vmatpush.msra.mxu0 0.0
    %294 = vmatpush.msra.mxu0 0.0
    %295 = vmatpush.msra.mxu0 0.0
    %296 = vmatpush.msra.mxu0 0.0
    %297 = vmatpush.msra.mxu0 0.0
    %298 = vmatpush.msra.mxu0 0.0
    %299 = vmatpush.msra.mxu0 0.0
    %300 = vmatpush.msra.mxu0 0.0
    %301 = vmatpush.msra.mxu0 0.0
    %302 = vmatpush.msra.mxu0 0.0
    %303 = vmatpush.msra.mxu0 %v280
    %304 = vmatpush.msra.mxu0 %v278
    %305 = vmatmul.f32.gmra.mxu0 %v284
    %v306 = vpop.f32.mrf.mxu0
    %v307 = vadd.f32 0.0, %v306
    %308 = vmatmul.f32.gmra.mxu0 %v287
    %v309 = vpop.f32.mrf.mxu0
    %v310 = vadd.f32 0.0, %v309
    %311 = vdwg.mxu0
    %312 = vrot.lane.b32.xlu0 %v115, 112
    %v313 = vpop.permute.xlu0 %312
    %314 = vrot.lane.b32.xlu0 %v118, 112
    %v315 = vpop.permute.xlu0 %314
    %316 = vrot.lane.b32.xlu0 %v115, 80
    %v317 = vpop.permute.xlu0 %316
    %318 = vrot.lane.b32.xlu0 %v118, 80
    %v319 = vpop.permute.xlu0 %318
    %v320 = vsel %vm126, %v313, 0
    %v322 = vsel %vm126, %v315, 0
    %v324 = vsel %vm126, %v317, 0
    %v326 = vsel %vm126, %v319, 0
    %328 = vmatpush.xpose.msra.mxu0 0.0
    %329 = vmatpush.xpose.msra.mxu0 0.0
    %330 = vmatpush.xpose.msra.mxu0 0.0
    %331 = vmatpush.xpose.msra.mxu0 0.0
    %332 = vmatpush.xpose.msra.mxu0 0.0
    %333 = vmatpush.xpose.msra.mxu0 0.0
    %334 = vmatpush.xpose.msra.mxu0 0.0
    %335 = vmatpush.xpose.msra.mxu0 0.0
    %336 = vmatpush.xpose.msra.mxu0 0.0
    %337 = vmatpush.xpose.msra.mxu0 0.0
    %338 = vmatpush.xpose.msra.mxu0 0.0
    %339 = vmatpush.xpose.msra.mxu0 0.0
    %340 = vmatpush.xpose.msra.mxu0 0.0
    %341 = vmatpush.xpose.msra.mxu0 0.0
    %342 = vmatpush.xpose.msra.mxu0 %v326
    %343 = vmatpush.xpose.msra.mxu0 %v324
    %344 = vmatmul.f32.gmra.mxu0 %v320
    %v345 = vpop.f32.mrf.mxu0
    %v346 = vadd.f32 %v80, %v345
    %347 = vmatmul.f32.gmra.mxu0 %v322
    %v348 = vpop.f32.mrf.mxu0
    %v349 = vadd.f32 %v81, %v348
    %350 = vdwg.mxu0
    %v351 = vsel %vm158, %v346, -inf
    %352 = vmax.xlane.f32.xlu0 %v351
    %v353 = vpop.xlane.xlu0 %352
    %v354 = vsel %vm158, %v349, -inf
    %355 = vmax.xlane.f32.xlu0 %v354
    %v356 = vpop.xlane.xlu0 %355
    %v357 = vsub.f32 %v346, %v353
    %v358 = vsub.f32 %v349, %v356
    %v359 = vmul.f32 %v357, 1.442695
    %v360 = vpow.pop %v359
    %v361 = vmul.f32 %v358, 1.442695
    %v362 = vpow.pop %v361
    %v363 = vsel %vm158, %v360, 0.0
    %364 = vadd.xlane.f32.xlu0 %v363
    %v365 = vpop.xlane.xlu0 %364
    %v366 = vsel %vm158, %v362, 0.0
    %367 = vadd.xlane.f32.xlu0 %v366
    %v368 = vpop.xlane.xlu0 %367
    %v369 = vrcp.pop %v365
    %v370 = vrcp.pop %v368
    %v371 = vmul.f32 %v360, %v369
    %v372 = vmul.f32 %v362, %v370
    %373 = vrot.lane.b32.xlu0 %v115, 48
    %v374 = vpop.permute.xlu0 %373
    %375 = vrot.lane.b32.xlu0 %v118, 48
    %v376 = vpop.permute.xlu0 %375
    %v380 = vsel %vm158, %v371, 0
    %v383 = vsel %vm158, %v372, 0
    %385 = vmatpush.msra.mxu0 0.0
    %386 = vmatpush.msra.mxu0 0.0
    %387 = vmatpush.msra.mxu0 0.0
    %388 = vmatpush.msra.mxu0 0.0
    %389 = vmatpush.msra.mxu0 0.0
    %390 = vmatpush.msra.mxu0 0.0
    %391 = vmatpush.msra.mxu0 0.0
    %392 = vmatpush.msra.mxu0 0.0
    %393 = vmatpush.msra.mxu0 0.0
    %394 = vmatpush.msra.mxu0 0.0
    %395 = vmatpush.msra.mxu0 0.0
    %396 = vmatpush.msra.mxu0 0.0
    %397 = vmatpush.msra.mxu0 0.0
    %398 = vmatpush.msra.mxu0 0.0
    %399 = vmatpush.msra.mxu0 %v376
    %400 = vmatpush.msra.mxu0 %v374
    %401 = vmatmul.f32.gmra.mxu0 %v380
    %v402 = vpop.f32.mrf.mxu0
    %v403 = vadd.f32 0.0, %v402
    %404 = vmatmul.f32.gmra.mxu0 %v383
    %v405 = vpop.f32.mrf.mxu0
    %v406 = vadd.f32 0.0, %v405
    %407 = vdwg.mxu0
    %408 = vrot.lane.b32.xlu0 %v115, 104
    %v409 = vpop.permute.xlu0 %408
    %410 = vrot.lane.b32.xlu0 %v118, 104
    %v411 = vpop.permute.xlu0 %410
    %412 = vrot.lane.b32.xlu0 %v115, 72
    %v413 = vpop.permute.xlu0 %412
    %414 = vrot.lane.b32.xlu0 %v118, 72
    %v415 = vpop.permute.xlu0 %414
    %v416 = vsel %vm126, %v409, 0
    %v418 = vsel %vm126, %v411, 0
    %v420 = vsel %vm126, %v413, 0
    %v422 = vsel %vm126, %v415, 0
    %424 = vmatpush.xpose.msra.mxu0 0.0
    %425 = vmatpush.xpose.msra.mxu0 0.0
    %426 = vmatpush.xpose.msra.mxu0 0.0
    %427 = vmatpush.xpose.msra.mxu0 0.0
    %428 = vmatpush.xpose.msra.mxu0 0.0
    %429 = vmatpush.xpose.msra.mxu0 0.0
    %430 = vmatpush.xpose.msra.mxu0 0.0
    %431 = vmatpush.xpose.msra.mxu0 0.0
    %432 = vmatpush.xpose.msra.mxu0 0.0
    %433 = vmatpush.xpose.msra.mxu0 0.0
    %434 = vmatpush.xpose.msra.mxu0 0.0
    %435 = vmatpush.xpose.msra.mxu0 0.0
    %436 = vmatpush.xpose.msra.mxu0 0.0
    %437 = vmatpush.xpose.msra.mxu0 0.0
    %438 = vmatpush.xpose.msra.mxu0 %v422
    %439 = vmatpush.xpose.msra.mxu0 %v420
    %440 = vmatmul.f32.gmra.mxu0 %v416
    %v441 = vpop.f32.mrf.mxu0
    %v442 = vadd.f32 %v80, %v441
    %443 = vmatmul.f32.gmra.mxu0 %v418
    %v444 = vpop.f32.mrf.mxu0
    %v445 = vadd.f32 %v81, %v444
    %446 = vdwg.mxu0
    %v447 = vsel %vm158, %v442, -inf
    %448 = vmax.xlane.f32.xlu0 %v447
    %v449 = vpop.xlane.xlu0 %448
    %v450 = vsel %vm158, %v445, -inf
    %451 = vmax.xlane.f32.xlu0 %v450
    %v452 = vpop.xlane.xlu0 %451
    %v453 = vsub.f32 %v442, %v449
    %v454 = vsub.f32 %v445, %v452
    %v455 = vmul.f32 %v453, 1.442695
    %v456 = vpow.pop %v455
    %v457 = vmul.f32 %v454, 1.442695
    %v458 = vpow.pop %v457
    %v459 = vsel %vm158, %v456, 0.0
    %460 = vadd.xlane.f32.xlu0 %v459
    %v461 = vpop.xlane.xlu0 %460
    %v462 = vsel %vm158, %v458, 0.0
    %463 = vadd.xlane.f32.xlu0 %v462
    %v464 = vpop.xlane.xlu0 %463
    %v465 = vrcp.pop %v461
    %v466 = vrcp.pop %v464
    %v467 = vmul.f32 %v456, %v465
    %v468 = vmul.f32 %v458, %v466
    %469 = vrot.lane.b32.xlu0 %v115, 40
    %v470 = vpop.permute.xlu0 %469
    %471 = vrot.lane.b32.xlu0 %v118, 40
    %v472 = vpop.permute.xlu0 %471
    %v476 = vsel %vm158, %v467, 0
    %v479 = vsel %vm158, %v468, 0
    %481 = vmatpush.msra.mxu0 0.0
    %482 = vmatpush.msra.mxu0 0.0
    %483 = vmatpush.msra.mxu0 0.0
    %484 = vmatpush.msra.mxu0 0.0
    %485 = vmatpush.msra.mxu0 0.0
    %486 = vmatpush.msra.mxu0 0.0
    %487 = vmatpush.msra.mxu0 0.0
    %488 = vmatpush.msra.mxu0 0.0
    %489 = vmatpush.msra.mxu0 0.0
    %490 = vmatpush.msra.mxu0 0.0
    %491 = vmatpush.msra.mxu0 0.0
    %492 = vmatpush.msra.mxu0 0.0
    %493 = vmatpush.msra.mxu0 0.0
    %494 = vmatpush.msra.mxu0 0.0
    %495 = vmatpush.msra.mxu0 %v472
    %496 = vmatpush.msra.mxu0 %v470
    %497 = vmatmul.f32.gmra.mxu0 %v476
    %v498 = vpop.f32.mrf.mxu0
    %v499 = vadd.f32 0.0, %v498
    %500 = vmatmul.f32.gmra.mxu0 %v479
    %v501 = vpop.f32.mrf.mxu0
    %v502 = vadd.f32 0.0, %v501
    %503 = vdwg.mxu0
    %506 = vrot.lane.b32.xlu0 %v307, 8
    %v507 = vpop.permute.xlu0 %506
    %508 = vrot.lane.b32.xlu0 %v310, 8
    %v509 = vpop.permute.xlu0 %508
    %514 = vrot.lane.b32.xlu0 %v403, 16
    %v515 = vpop.permute.xlu0 %514
    %516 = vrot.lane.b32.xlu0 %v406, 16
    %v517 = vpop.permute.xlu0 %516
    %522 = vrot.lane.b32.xlu0 %v499, 24
    %v523 = vpop.permute.xlu0 %522
    %524 = vrot.lane.b32.xlu0 %v502, 24
    %v525 = vpop.permute.xlu0 %524
    %v528 = vsel %vm126, %v211, %v507
    %v529 = vsel %vm126, %v214, %v509
    %v530 = vsel %vm158, %v528, %v515
    %v531 = vsel %vm158, %v529, %v517
    %vm532 = vcmask 195584
    %v533 = vsel %vm532, %v530, %v523
    %v534 = vsel %vm532, %v531, %v525
    %v535 = vld [vmem:[#allocation7] sm:$0x1]
    %v536 = vld [vmem:[%s4] sm:$0xff]
    %v537 = vld [vmem:[%s4 + $0x8] sm:$0xff]
    %v538 = vld [vmem:[%s4 + $0x10] sm:$0xff]
    %v539 = vld [vmem:[%s4 + $0x18] sm:$0xff]
    %v540 = vperm.slane %v535, 0
    %v542 = vsel %vm90, %v533, 0
    %v545 = vsel %vm90, %v534, 0
    %547 = vmatpush.msra.mxu0 0.0
    %548 = vmatpush.msra.mxu0 0.0
    %549 = vmatpush.msra.mxu0 0.0
    %550 = vmatpush.msra.mxu0 0.0
    %551 = vmatpush.msra.mxu0 0.0
    %552 = vmatpush.msra.mxu0 0.0
    %553 = vmatpush.msra.mxu0 0.0
    %554 = vmatpush.msra.mxu0 0.0
    %555 = vmatpush.msra.mxu0 0.0
    %556 = vmatpush.msra.mxu0 0.0
    %557 = vmatpush.msra.mxu0 0.0
    %558 = vmatpush.msra.mxu0 0.0
    %559 = vmatpush.msra.mxu0 %v539
    %560 = vmatpush.msra.mxu0 %v538
    %561 = vmatpush.msra.mxu0 %v537
    %562 = vmatpush.msra.mxu0 %v536
    %563 = vmatmul.f32.gmra.mxu0 %v542
    %v564 = vpop.f32.mrf.mxu0
    %v565 = vadd.f32 %v540, %v564
    %566 = vmatmul.f32.gmra.mxu0 %v545
    %v567 = vpop.f32.mrf.mxu0
    %v568 = vadd.f32 %v540, %v567
    %569 = vdwg.mxu0
    %v570 = vld [vmem:[#allocation7 + $0x1] sm:$0x1]
    %v571 = vld [vmem:[#allocation7 + $0x2] sm:$0x1]
    %v572 = vadd.f32 %v78, %v565
    %v573 = vadd.f32 %v79, %v568
    %v574 = vsel %vm90, %v572, 0.0
    %575 = vadd.xlane.f32.xlu0 %v574
    %v576 = vpop.xlane.xlu0 %575
    %v577 = vsel %vm90, %v573, 0.0
    %578 = vadd.xlane.f32.xlu0 %v577
    %v579 = vpop.xlane.xlu0 %578
    %v580 = vrcp.pop 32.0
    %v581 = vmul.f32 32.0, %v580
    %v582 = vsub.f32 1.0, %v581
    %v583 = vmul.f32 %v580, %v582
    %v584 = vadd.f32 %v580, %v583
    %vm585 = vweird.f32 %v580
    %v586 = vsel %vm585, %v580, %v584
    %v587 = vmul.f32 %v576, %v586
    %v588 = vmul.f32 %v579, %v586
    %v589 = vsub.f32 %v572, %v587
    %v590 = vsub.f32 %v573, %v588
    %v591 = vmul.f32 %v589, %v589
    %v592 = vmul.f32 %v590, %v590
    %v593 = vsel %vm90, %v591, 0.0
    %594 = vadd.xlane.f32.xlu0 %v593
    %v595 = vpop.xlane.xlu0 %594
    %v596 = vsel %vm90, %v592, 0.0
    %597 = vadd.xlane.f32.xlu0 %v596
    %v598 = vpop.xlane.xlu0 %597
    %v599 = vmul.f32 %v595, %v586
    %v600 = vmul.f32 %v598, %v586
    %v601 = vadd.f32 %v599, 1e-05
    %v602 = vadd.f32 %v600, 1e-05
    %v603 = vrsqrt.pop %v601
    %v604 = vmul.f32 %v603, %v601
    %v605 = vmul.f32 %v604, %v603
    %v606 = vmul.f32 0.5, %v605
    %v607 = vsub.f32 1.5, %v606
    %v608 = vmul.f32 %v603, %v607
    %vm609 = vweird.f32 %v601
    %vm610 = vweird.f32 %v603
    %vm611 = vmor %vm609, %vm610
    %v612 = vsel %vm611, %v603, %v608
    %v613 = vrsqrt.pop %v602
    %v614 = vmul.f32 %v613, %v602
    %v615 = vmul.f32 %v614, %v613
    %v616 = vmul.f32 0.5, %v615
    %v617 = vsub.f32 1.5, %v616
    %v618 = vmul.f32 %v613, %v617
    %vm619 = vweird.f32 %v602
    %vm620 = vweird.f32 %v613
    %vm621 = vmor %vm619, %vm620
    %v622 = vsel %vm621, %v613, %v618
    %v623 = vmul.f32 %v589, %v612
    %v624 = vmul.f32 %v590, %v622
    %v625 = vperm.slane %v570, 0
    %v626 = vmul.f32 %v623, %v625
    %v627 = vmul.f32 %v624, %v625
    %v628 = vperm.slane %v571, 0
    %v629 = vadd.f32 %v626, %v628
    %v630 = vadd.f32 %v627, %v628
    %v631 = vld [vmem:[%s5] sm:$0xff]
    %v632 = vld [vmem:[%s5 + $0x8] sm:$0xff]
    %v633 = vld [vmem:[%s5 + $0x10] sm:$0xff]
    %v634 = vld [vmem:[%s5 + $0x18] sm:$0xff]
    %v635 = vld [vmem:[%s6] sm:$0x1]
    %v637 = vperm.slane %v635, 0
    %v640 = vsel %vm90, %v629, 0
    %v643 = vsel %vm90, %v630, 0
    %645 = vmatpush.msra.mxu0 0.0
    %646 = vmatpush.msra.mxu0 0.0
    %647 = vmatpush.msra.mxu0 0.0
    %648 = vmatpush.msra.mxu0 0.0
    %649 = vmatpush.msra.mxu0 0.0
    %650 = vmatpush.msra.mxu0 0.0
    %651 = vmatpush.msra.mxu0 0.0
    %652 = vmatpush.msra.mxu0 0.0
    %653 = vmatpush.msra.mxu0 0.0
    %654 = vmatpush.msra.mxu0 0.0
    %655 = vmatpush.msra.mxu0 0.0
    %656 = vmatpush.msra.mxu0 0.0
    %657 = vmatpush.msra.mxu0 %v634
    %658 = vmatpush.msra.mxu0 %v633
    %659 = vmatpush.msra.mxu0 %v632
    %660 = vmatpush.msra.mxu0 %v631
    %661 = vmatmul.f32.gmra.mxu0 %v640
    %v662 = vpop.f32.mrf.mxu0
    %v663 = vadd.f32 %v637, %v662
    %664 = vmatmul.f32.gmra.mxu0 %v643
    %v665 = vpop.f32.mrf.mxu0
    %v666 = vadd.f32 %v637, %v665
    %667 = vdwg.mxu0
    %v668 = vmax.f32 %v663, 0.0
    %v669 = vmax.f32 %v666, 0.0
    %v670 = vld [vmem:[#allocation7 + $0x3] sm:$0x1]
    %v671 = vld [vmem:[%s7] sm:$0xff]
    %v672 = vld [vmem:[%s7 + $0x8] sm:$0xff]
    %v673 = vld [vmem:[%s7 + $0x10] sm:$0xff]
    %v674 = vld [vmem:[%s7 + $0x18] sm:$0xff]
    %v675 = vld [vmem:[%s7 + $0x20] sm:$0xff]
    %v676 = vld [vmem:[%s7 + $0x28] sm:$0xff]
    %v677 = vld [vmem:[%s7 + $0x30] sm:$0xff]
    %v678 = vld [vmem:[%s7 + $0x38] sm:$0xff]
    %v679 = vperm.slane %v670, 0
    %vm680 = vcmask 523264
    %v682 = vsel %vm680, %v668, 0
    %v685 = vsel %vm680, %v669, 0
    %687 = vmatpush.msra.mxu0 0.0
    %688 = vmatpush.msra.mxu0 0.0
    %689 = vmatpush.msra.mxu0 0.0
    %690 = vmatpush.msra.mxu0 0.0
    %691 = vmatpush.msra.mxu0 0.0
    %692 = vmatpush.msra.mxu0 0.0
    %693 = vmatpush.msra.mxu0 0.0
    %694 = vmatpush.msra.mxu0 0.0
    %695 = vmatpush.msra.mxu0 %v678
    %696 = vmatpush.msra.mxu0 %v677
    %697 = vmatpush.msra.mxu0 %v676
    %698 = vmatpush.msra.mxu0 %v675
    %699 = vmatpush.msra.mxu0 %v674
    %700 = vmatpush.msra.mxu0 %v673
    %701 = vmatpush.msra.mxu0 %v672
    %702 = vmatpush.msra.mxu0 %v671
    %703 = vmatmul.f32.gmra.mxu0 %v682
    %v704 = vpop.f32.mrf.mxu0
    %v705 = vadd.f32 %v679, %v704
    %706 = vmatmul.f32.gmra.mxu0 %v685
    %v707 = vpop.f32.mrf.mxu0
    %v708 = vadd.f32 %v679, %v707
    %709 = vdwg.mxu0
    %v710 = vld [vmem:[#allocation7 + $0x4] sm:$0x1]
    %v711 = vld [vmem:[#allocation7 + $0x5] sm:$0x1]
    %v712 = vadd.f32 %v629, %v705
    %v713 = vadd.f32 %v630, %v708
    %v714 = vsel %vm90, %v712, 0.0
    %715 = vadd.xlane.f32.xlu0 %v714
    %v716 = vpop.xlane.xlu0 %715
    %v717 = vsel %vm90, %v713, 0.0
    %718 = vadd.xlane.f32.xlu0 %v717
    %v719 = vpop.xlane.xlu0 %718
    %v720 = vmul.f32 %v716, %v586
    %v721 = vmul.f32 %v719, %v586
    %v722 = vsub.f32 %v712, %v720
    %v723 = vsub.f32 %v713, %v721
    %v724 = vmul.f32 %v722, %v722
    %v725 = vmul.f32 %v723, %v723
    %v726 = vsel %vm90, %v724, 0.0
    %727 = vadd.xlane.f32.xlu0 %v726
    %v728 = vpop.xlane.xlu0 %727
    %v729 = vsel %vm90, %v725, 0.0
    %730 = vadd.xlane.f32.xlu0 %v729
    %v731 = vpop.xlane.xlu0 %730
    %v732 = vmul.f32 %v728, %v586
    %v733 = vmul.f32 %v731, %v586
    %v734 = vadd.f32 %v732, 1e-05
    %v735 = vadd.f32 %v733, 1e-05
    %v736 = vrsqrt.pop %v734
    %v737 = vmul.f32 %v736, %v734
    %v738 = vmul.f32 %v737, %v736
    %v739 = vmul.f32 0.5, %v738
    %v740 = vsub.f32 1.5, %v739
    %v741 = vmul.f32 %v736, %v740
    %vm742 = vweird.f32 %v734
    %vm743 = vweird.f32 %v736
    %vm744 = vmor %vm742, %vm743
    %v745 = vsel %vm744, %v736, %v741
    %v746 = vrsqrt.pop %v735
    %v747 = vmul.f32 %v746, %v735
    %v748 = vmul.f32 %v747, %v746
    %v749 = vmul.f32 0.5, %v748
    %v750 = vsub.f32 1.5, %v749
    %v751 = vmul.f32 %v746, %v750
    %vm752 = vweird.f32 %v735
    %vm753 = vweird.f32 %v746
    %vm754 = vmor %vm752, %vm753
    %v755 = vsel %vm754, %v746, %v751
    %v756 = vmul.f32 %v722, %v745
    %v757 = vmul.f32 %v723, %v755
    %v758 = vperm.slane %v710, 0
    %v759 = vmul.f32 %v756, %v758
    %v760 = vmul.f32 %v757, %v758
    %v761 = vperm.slane %v711, 0
    %v762 = vadd.f32 %v759, %v761
    %v763 = vadd.f32 %v760, %v761
    %764 = vst.msk [vmem:[#allocation8] sm:$0xff] %vm90, %v762
    %765 = vst.msk [vmem:[#allocation8 + $0x8] sm:$0xff] %vm90, %v763
    // Predicated region
    $region50: #{tpu_custom_call.1} parent=1 // pred_check
      _
    $region51: #{tpu_custom_call.1} parent=1 // pred_check_branch
      %767 = sbr.rel (0) target = $region53
    $region52: #{tpu_custom_call.1} parent=1 // pred_region
      %769 = vsyncadd [#allocation4], 0
      %s770 = sshll.u32 [#allocation8], 4
      %s771 = int_to_ptr.vmem [resolvable:$true] %s770
      %s772 = sshll.u32 %s9, 4
      %s773 = int_to_ptr.hbm [resolvable:$true] %s772
      %778 = dma.vmem_to_hbm [thread:$0]  %s771, 256, %s773, [#allocation4], 128, 128, 8
    $region53: #{tpu_custom_call.1} parent=1 // pred_fallthru
      _
    // Predicated region
    $region54: #{tpu_custom_call.1} parent=1 // pred_check
      _
    $region55: #{tpu_custom_call.1} parent=1 // pred_check_branch
      %780 = sbr.rel (0) target = $region57
    $region56: #{tpu_custom_call.1} parent=1 // pred_region
      %782 = dma.done [#allocation4], 256
    $region57: #{tpu_custom_call.1} parent=1 // pred_fallthru
      _
    %783 = vsyncpa [#allocation3], 1
    %784 = vsyncpa [#allocation6], 1
    %785 = vsyncpa [#allocation4], 1

</llo_original>
